<compile_context>
chip_gen: v7x
topology: tpu7x:2x2x1
jax: 0.10.0
libtpu: 0.0.40
codegen_flags: <defaults>
</compile_context>

<pallas_src>
import math

import jax
import jax.numpy as jnp
from jax import lax
from jax.experimental import pallas as pl
from jax.experimental.pallas import tpu as pltpu

NEG_SLOPE = 0.01   # F.leaky_relu default negative_slope
LANES = 128


def _leaky_relu(x):
    return jnp.where(x > 0, x, NEG_SLOPE * x)


def _round_up(n, m):
    return ((n + m - 1) // m) * m


def _pick_bm(B):
    """Batch rows per grid step (static, from the shape).

    - tiny batch: one step covering the whole (16-rounded) batch;
    - moderate/large batch: >=2 steps so the 'parallel' axis can be split
      across v7x's two TensorCores, capped at 1024 rows/step.
    """
    if B <= 128:
        return _round_up(max(B, 1), 16)
    return min(1024, _round_up(-(-B // 2), 16))


def actor_kernel(x_ref, w_ref, b_ref, out_ref):
    """fc1 -> leaky_relu -> fc2 -> leaky_relu -> fc3 -> 2-class softmax.

    x_ref   : (bm, 128)  bf16  observations, zero-padded to 128 lanes
    w_ref   : (128, 384) bf16  packed weights [w1 | w2 | wd], each 128x128
    b_ref   : (1, 384)   f32   packed biases  [b1 | b2 | bd]
    out_ref : (bm, 128)  bf16  lane 0 = P(action 0), lane 1 = P(action 1)
    """
    x = x_ref[...]                                           # bf16, no cast

    # fc1 + leaky_relu (bf16 MXU operands, f32 accumulate / elementwise)
    h = jnp.dot(x, w_ref[:, 0:128], preferred_element_type=jnp.float32)
    h = _leaky_relu(h + b_ref[:, 0:128])

    # fc2 + leaky_relu
    h = jnp.dot(h.astype(jnp.bfloat16), w_ref[:, 128:256],
                preferred_element_type=jnp.float32)
    h = _leaky_relu(h + b_ref[:, 128:256])

    # fc3 as the logit difference d = l1 - l0, lane-replicated (every column
    # of the third packed block is the same difference vector).
    d = jnp.dot(h.astype(jnp.bfloat16), w_ref[:, 256:384],
                preferred_element_type=jnp.float32)
    d = d + b_ref[:, 256:384]
    d = jnp.clip(d, -80.0, 80.0)

    # 2-class softmax, purely elementwise (VPU + EUP, no XLU reduce):
    #   p0 = 1 / (1 + exp(l1 - l0)),  p1 = 1 - p0
    p0 = pl.reciprocal(1.0 + jnp.exp(d), approx=True)
    p0 = jnp.clip(p0, 0.0, 1.0)      # approx recip can overshoot by ~2^-12
    lane = lax.broadcasted_iota(jnp.int32, p0.shape, 1)
    out_ref[...] = jnp.where(lane == 0, p0, 1.0 - p0).astype(out_ref.dtype)


@jax.jit
def actor_forward(x, packed_params):
    """x: (B, 4) f32 -> probs: (B, 2) f32 (Categorical probabilities)."""
    w_slab, b_slab = packed_params
    B, F = x.shape

    bm = _pick_bm(B)
    B_pad = _round_up(B, bm)

    # bf16 input slab: zero padding is mathematically inert.
    x_pad = jnp.zeros((B_pad, LANES), jnp.bfloat16)
    x_pad = x_pad.at[:B, :F].set(x.astype(jnp.bfloat16))

    out = pl.pallas_call(
        actor_kernel,
        out_shape=jax.ShapeDtypeStruct((B_pad, LANES), jnp.bfloat16),
        grid=(B_pad // bm,),
        in_specs=[
            pl.BlockSpec((bm, LANES), lambda i: (i, 0)),
            # Constant block index -> fetched once per call, not per step.
            pl.BlockSpec((LANES, 3 * LANES), lambda i: (0, 0)),
            pl.BlockSpec((1, 3 * LANES), lambda i: (0, 0)),
        ],
        out_specs=pl.BlockSpec((bm, LANES), lambda i: (i, 0)),
        compiler_params=pltpu.CompilerParams(
            dimension_semantics=("parallel",)),
    )(x_pad, w_slab, b_slab)

    # Rows B..B_pad-1 and lanes >= 2 are padding; slice them off here.
    return out[:B, :2].astype(jnp.float32)


def init_raw_params(key):
    """Mirror the PyTorch init: xavier_uniform weights, default Linear bias."""
    dims = [(4, 100), (100, 100), (100, 2)]
    keys = jax.random.split(key, 2 * len(dims))
    raw = []
    for i, (fan_in, fan_out) in enumerate(dims):
        wb = math.sqrt(6.0 / (fan_in + fan_out))
        w = jax.random.uniform(keys[2 * i], (fan_in, fan_out),
                               minval=-wb, maxval=wb, dtype=jnp.float32)
        bb = 1.0 / math.sqrt(fan_in)
        b = jax.random.uniform(keys[2 * i + 1], (fan_out,),
                               minval=-bb, maxval=bb, dtype=jnp.float32)
        raw.append((w, b))
    return raw


def pack_params(raw):
    """Pack (w1,b1),(w2,b2),(w3,b3) into one bf16 weight slab + one f32 bias slab."""
    (w1, b1), (w2, b2), (w3, b3) = raw

    w_slab = jnp.zeros((LANES, 3 * LANES), jnp.float32)
    w_slab = w_slab.at[:w1.shape[0], 0:w1.shape[1]].set(w1)
    w_slab = w_slab.at[:w2.shape[0], LANES:LANES + w2.shape[1]].set(w2)
    wd = w3[:, 1] - w3[:, 0]                                    # (100,)
    w_slab = w_slab.at[:wd.shape[0], 2 * LANES:3 * LANES].set(
        jnp.tile(wd[:, None], (1, LANES)))
    w_slab = w_slab.astype(jnp.bfloat16)

    b_slab = jnp.zeros((1, 3 * LANES), jnp.float32)
    b_slab = b_slab.at[0, 0:b1.shape[0]].set(b1)
    b_slab = b_slab.at[0, LANES:LANES + b2.shape[0]].set(b2)
    b_slab = b_slab.at[0, 2 * LANES:3 * LANES].set(b3[1] - b3[0])
    return w_slab, b_slab


def reference_forward(x, raw):
    (w1, b1), (w2, b2), (w3, b3) = raw
    h = _leaky_relu(x @ w1 + b1)
    h = _leaky_relu(h @ w2 + b2)
    logits = h @ w3 + b3
    return jax.nn.softmax(logits, axis=-1)


if __name__ == "__main__":
    key = jax.random.PRNGKey(0)
    k_param, k_x = jax.random.split(key)

    raw = init_raw_params(k_param)
    packed = pack_params(raw)
    x = jax.random.normal(k_x, (8, 4), dtype=jnp.float32)  # batch=8, obs dim=4

    probs = jax.block_until_ready(actor_forward(x, packed))
    ref = reference_forward(x, raw)

    # sanity: shape, normalization (bf16 output -> looser), agreement with f32 ref
    assert probs.shape == (8, 2)
    assert bool(jnp.all(jnp.abs(jnp.sum(probs, axis=-1) - 1.0) < 1e-2))
    assert bool(jnp.all(jnp.abs(probs - ref) < 3e-2)), \
        f"max abs err {float(jnp.max(jnp.abs(probs - ref)))}"

    print("KERNEL_OK")
</pallas_src>

<mosaic_0001>
module attributes {stable_mosaic.version = 11 : i64} {
  func.func @actor_kernel(%arg0: i32, %arg1: memref<16x128xbf16, #tpu.memory_space<vmem>>, %arg2: memref<128x384xbf16, #tpu.memory_space<vmem>>, %arg3: memref<1x384xf32, #tpu.memory_space<vmem>>, %arg4: memref<16x128xbf16, #tpu.memory_space<vmem>>) attributes {dimension_semantics = [#tpu.dimension_semantics<parallel>], iteration_bounds = array<i64: 1>, scalar_prefetch = 0 : i64, scratch_operands = 0 : i64, tpu.core_type = #tpu.core_type<tc>, window_params = [{transform_indices = @transform_0, window_bounds = array<i64: 16, 128>}, {pipeline_mode = #tpu.pipeline_mode<synchronous>, transform_indices = @transform_1, window_bounds = array<i64: 128, 384>}, {pipeline_mode = #tpu.pipeline_mode<synchronous>, transform_indices = @transform_2, window_bounds = array<i64: 1, 384>}, {transform_indices = @transform_3, window_bounds = array<i64: 16, 128>}]} {
    %c0 = arith.constant 0 : index
    %c0_0 = arith.constant 0 : index
    %0 = vector.load %arg1[%c0, %c0_0] : memref<16x128xbf16, #tpu.memory_space<vmem>>, vector<16x128xbf16>
    %c0_1 = arith.constant 0 : index
    %c0_2 = arith.constant 0 : index
    %1 = vector.load %arg2[%c0_1, %c0_2] : memref<128x384xbf16, #tpu.memory_space<vmem>>, vector<128x128xbf16>
    %cst = arith.constant dense<0.000000e+00> : vector<16x128xf32>
    %2 = tpu.matmul %0, %1, %cst {dimension_numbers = #tpu.dot_dimension_numbers<[1], [0], [0], [1], [0, 0, 1, 1], [], []>} : vector<16x128xbf16>, vector<128x128xbf16>, vector<16x128xf32> -> vector<16x128xf32>
    %c0_3 = arith.constant 0 : index
    %c0_4 = arith.constant 0 : index
    %3 = vector.load %arg3[%c0_3, %c0_4] : memref<1x384xf32, #tpu.memory_space<vmem>>, vector<1x128xf32>
    %4 = vector.broadcast %3 : vector<1x128xf32> to vector<16x128xf32>
    %5 = arith.addf %2, %4 : vector<16x128xf32>
    %cst_5 = arith.constant 0.000000e+00 : f32
    %6 = vector.broadcast %cst_5 : f32 to vector<16x128xf32>
    %7 = arith.cmpf ogt, %5, %6 : vector<16x128xf32>
    %cst_6 = arith.constant 0.00999999977 : f32
    %8 = vector.broadcast %cst_6 : f32 to vector<16x128xf32>
    %9 = arith.mulf %8, %5 : vector<16x128xf32>
    %10 = arith.select %7, %5, %9 : vector<16x128xi1>, vector<16x128xf32>
    %11 = arith.truncf %10 : vector<16x128xf32> to vector<16x128xbf16>
    %c0_7 = arith.constant 0 : index
    %c128 = arith.constant 128 : index
    %12 = vector.load %arg2[%c0_7, %c128] : memref<128x384xbf16, #tpu.memory_space<vmem>>, vector<128x128xbf16>
    %cst_8 = arith.constant dense<0.000000e+00> : vector<16x128xf32>
    %13 = tpu.matmul %11, %12, %cst_8 {dimension_numbers = #tpu.dot_dimension_numbers<[1], [0], [0], [1], [0, 0, 1, 1], [], []>} : vector<16x128xbf16>, vector<128x128xbf16>, vector<16x128xf32> -> vector<16x128xf32>
    %c0_9 = arith.constant 0 : index
    %c128_10 = arith.constant 128 : index
    %14 = vector.load %arg3[%c0_9, %c128_10] : memref<1x384xf32, #tpu.memory_space<vmem>>, vector<1x128xf32>
    %15 = vector.broadcast %14 : vector<1x128xf32> to vector<16x128xf32>
    %16 = arith.addf %13, %15 : vector<16x128xf32>
    %cst_11 = arith.constant 0.000000e+00 : f32
    %17 = vector.broadcast %cst_11 : f32 to vector<16x128xf32>
    %18 = arith.cmpf ogt, %16, %17 : vector<16x128xf32>
    %cst_12 = arith.constant 0.00999999977 : f32
    %19 = vector.broadcast %cst_12 : f32 to vector<16x128xf32>
    %20 = arith.mulf %19, %16 : vector<16x128xf32>
    %21 = arith.select %18, %16, %20 : vector<16x128xi1>, vector<16x128xf32>
    %22 = arith.truncf %21 : vector<16x128xf32> to vector<16x128xbf16>
    %c0_13 = arith.constant 0 : index
    %c256 = arith.constant 256 : index
    %23 = vector.load %arg2[%c0_13, %c256] : memref<128x384xbf16, #tpu.memory_space<vmem>>, vector<128x128xbf16>
    %cst_14 = arith.constant dense<0.000000e+00> : vector<16x128xf32>
    %24 = tpu.matmul %22, %23, %cst_14 {dimension_numbers = #tpu.dot_dimension_numbers<[1], [0], [0], [1], [0, 0, 1, 1], [], []>} : vector<16x128xbf16>, vector<128x128xbf16>, vector<16x128xf32> -> vector<16x128xf32>
    %c0_15 = arith.constant 0 : index
    %c256_16 = arith.constant 256 : index
    %25 = vector.load %arg3[%c0_15, %c256_16] : memref<1x384xf32, #tpu.memory_space<vmem>>, vector<1x128xf32>
    %26 = vector.broadcast %25 : vector<1x128xf32> to vector<16x128xf32>
    %27 = arith.addf %24, %26 : vector<16x128xf32>
    %cst_17 = arith.constant -8.000000e+01 : f32
    %cst_18 = arith.constant 8.000000e+01 : f32
    %28 = vector.broadcast %cst_17 : f32 to vector<16x128xf32>
    %29 = arith.maximumf %28, %27 : vector<16x128xf32>
    %30 = vector.broadcast %cst_18 : f32 to vector<16x128xf32>
    %31 = arith.minimumf %30, %29 : vector<16x128xf32>
    %32 = math.exp %31 : vector<16x128xf32>
    %cst_19 = arith.constant 1.000000e+00 : f32
    %33 = vector.broadcast %cst_19 : f32 to vector<16x128xf32>
    %34 = arith.addf %33, %32 : vector<16x128xf32>
    %35 = tpu.reciprocal %34 {approx = true} : vector<16x128xf32> -> vector<16x128xf32>
    %cst_20 = arith.constant 0.000000e+00 : f32
    %cst_21 = arith.constant 1.000000e+00 : f32
    %36 = vector.broadcast %cst_20 : f32 to vector<16x128xf32>
    %37 = arith.maximumf %36, %35 : vector<16x128xf32>
    %38 = vector.broadcast %cst_21 : f32 to vector<16x128xf32>
    %39 = arith.minimumf %38, %37 : vector<16x128xf32>
    %40 = tpu.iota {dimensions = array<i32: 1>} : vector<16x128xi32>
    %c0_i32 = arith.constant 0 : i32
    %41 = vector.broadcast %c0_i32 : i32 to vector<16x128xi32>
    %42 = arith.cmpi eq, %40, %41 : vector<16x128xi32>
    %cst_22 = arith.constant 1.000000e+00 : f32
    %43 = vector.broadcast %cst_22 : f32 to vector<16x128xf32>
    %44 = arith.subf %43, %39 : vector<16x128xf32>
    %45 = arith.select %42, %39, %44 : vector<16x128xi1>, vector<16x128xf32>
    %46 = arith.truncf %45 : vector<16x128xf32> to vector<16x128xbf16>
    %c0_23 = arith.constant 0 : index
    %c0_24 = arith.constant 0 : index
    %47 = vector.load %arg4[%c0_23, %c0_24] : memref<16x128xbf16, #tpu.memory_space<vmem>>, vector<16x128xbf16>
    tpu.vector_store %arg4[%c0_23, %c0_24], %46 {strides = array<i32>} : memref<16x128xbf16, #tpu.memory_space<vmem>>, vector<16x128xbf16>,
    return
  }
  func.func @transform_0(%arg0: i32) -> (i32, i32) {
    %c0_i32 = arith.constant 0 : i32
    %c0_i32_0 = arith.constant 0 : i32
    return %arg0, %c0_i32 : i32, i32
  }
  func.func @transform_1(%arg0: i32) -> (i32, i32) {
    %c0_i32 = arith.constant 0 : i32
    %c0_i32_0 = arith.constant 0 : i32
    %c0_i32_1 = arith.constant 0 : i32
    return %c0_i32, %c0_i32_0 : i32, i32
  }
  func.func @transform_2(%arg0: i32) -> (i32, i32) {
    %c0_i32 = arith.constant 0 : i32
    %c0_i32_0 = arith.constant 0 : i32
    %c0_i32_1 = arith.constant 0 : i32
    return %c0_i32, %c0_i32_0 : i32, i32
  }
  func.func @transform_3(%arg0: i32) -> (i32, i32) {
    %c0_i32 = arith.constant 0 : i32
    %c0_i32_0 = arith.constant 0 : i32
    return %arg0, %c0_i32 : i32, i32
  }
}

</mosaic_0001>

<llo_original>
// kernel: actor_forward.1
$region0: #{actor_forward.1}
  #allocation0 [shape = 'u32[]', space=smem, size = 0x4, offset = 0x4, fixed_abs, tag = 'smem constant byte address 0x4 - core index']
  #allocation1 [shape = 'u32[144,128]{1,0:T(1,128)}', space=vmem, size = 0x12000, scoped, tag = 'internal scratch']
  %s0 = inlined_call_operand.vmem [shape: bf16[16,128], index: 0, kind: input, shape index: {}]
  %s1 = inlined_call_operand.hbm [shape: bf16[128,384], index: 1, kind: input, shape index: {}]
  %s2 = inlined_call_operand.vmem [shape: f32[1,384], index: 2, kind: input, shape index: {}]
  %s3 = inlined_call_operand.vmem [shape: bf16[16,128], index: 3, kind: output, shape index: {}]
  %s4 = sld [smem:[#allocation0]]
  $region26: #{actor_forward.1} parent=0
    _
  %s6 = ssub.s32 1, %s4
  %s7 = scalar_select 0, %s6, %s4
  $region1: #{actor_forward.1} parent=0
    #allocation2 [shape = 'u8[98304]{0}', space=vmem, size = 0x18000, scoped, tag = 'input window, operand 1, single buffered']
    #allocation3 [shape = 's32[1]{0}', space=sflag, size = 0x4, scoped, tag = 'scoped memory for actor_forward.1']
    %8 = vsyncpa [#allocation3], 0
    // Predicated region
    $region2: #{actor_forward.1} parent=1 // pred_check
      _
    $region3: #{actor_forward.1} parent=1 // pred_check_branch
      %10 = sbr.rel (0) target = $region5
    $region4: #{actor_forward.1} parent=1 // pred_region
      _
    $region5: #{actor_forward.1} parent=1 // pred_fallthru
      _
    // Predicated region
    $region6: #{actor_forward.1} parent=1 // pred_check
      _
    $region7: #{actor_forward.1} parent=1 // pred_check_branch
      %12 = sbr.rel (0) target = $region9
    $region8: #{actor_forward.1} parent=1 // pred_region
      %s14 = ssub.s32 3072, 3072
      %15 = vsyncadd [#allocation3], %s14
      %s16 = sshll.u32 [#allocation2], 4
      %s17 = int_to_ptr.vmem [resolvable:$true] %s16
      %22 = dma.hbm_to_vmem [thread:$0]  %s1, 3072, %s17, [#allocation3], 192, 192, 12
    $region9: #{actor_forward.1} parent=1 // pred_fallthru
      _
    // Predicated region
    $region10: #{actor_forward.1} parent=1 // pred_check
      _
    $region11: #{actor_forward.1} parent=1 // pred_check_branch
      %24 = sbr.rel (0) target = $region13
    $region12: #{actor_forward.1} parent=1 // pred_region
      _
    $region13: #{actor_forward.1} parent=1 // pred_fallthru
      _
    // Predicated region
    $region14: #{actor_forward.1} parent=1 // pred_check
      _
    $region15: #{actor_forward.1} parent=1 // pred_check_branch
      %26 = sbr.rel (0) target = $region17
    $region16: #{actor_forward.1} parent=1 // pred_region
      %27 = dma.done [#allocation3], 3072
    $region17: #{actor_forward.1} parent=1 // pred_fallthru
      _
    %v29 = vld [vmem:[%s0] sm:$0xf]
    %v30 = vld [vmem:[%s0 + $0x4] sm:$0xf]
    %v31 = vld [vmem:[#allocation2] sm:$0xf]
    %v32 = vld [vmem:[#allocation2 + $0xc] sm:$0xf]
    %v33 = vld [vmem:[#allocation2 + $0x18] sm:$0xf]
    %v34 = vld [vmem:[#allocation2 + $0x24] sm:$0xf]
    %v35 = vld [vmem:[#allocation2 + $0x30] sm:$0xf]
    %v36 = vld [vmem:[#allocation2 + $0x3c] sm:$0xf]
    %v37 = vld [vmem:[#allocation2 + $0x48] sm:$0xf]
    %v38 = vld [vmem:[#allocation2 + $0x54] sm:$0xf]
    %v39 = vld [vmem:[#allocation2 + $0x60] sm:$0xf]
    %v40 = vld [vmem:[#allocation2 + $0x6c] sm:$0xf]
    %v41 = vld [vmem:[#allocation2 + $0x78] sm:$0xf]
    %v42 = vld [vmem:[#allocation2 + $0x84] sm:$0xf]
    %v43 = vld [vmem:[#allocation2 + $0x90] sm:$0xf]
    %v44 = vld [vmem:[#allocation2 + $0x9c] sm:$0xf]
    %v45 = vld [vmem:[#allocation2 + $0xa8] sm:$0xf]
    %v46 = vld [vmem:[#allocation2 + $0xb4] sm:$0xf]
    %v47 = vld [vmem:[%s2] sm:$0x1]
    %v49 = vlaneseq
    %v50 = vshrl.u32 %v49, 7
    %v51 = vsub.s32 0, %v50
    %v52 = vrot.slane %v47, %v51
    %v56 = vunpack.c.l.b16 %v29
    %v57 = vunpack.c.l.b16 %v30
    %v58 = vpack.c.b16 %v57, %v56
    %v76 = vunpack.c.l.b16 %v31
    %v77 = vunpack.c.l.b16 %v32
    %v78 = vunpack.c.l.b16 %v33
    %v79 = vunpack.c.l.b16 %v34
    %v80 = vunpack.c.l.b16 %v35
    %v81 = vunpack.c.l.b16 %v36
    %v82 = vunpack.c.l.b16 %v37
    %v83 = vunpack.c.l.b16 %v38
    %v84 = vunpack.c.l.b16 %v39
    %v85 = vunpack.c.l.b16 %v40
    %v86 = vunpack.c.l.b16 %v41
    %v87 = vunpack.c.l.b16 %v42
    %v88 = vunpack.c.l.b16 %v43
    %v89 = vunpack.c.l.b16 %v44
    %v90 = vunpack.c.l.b16 %v45
    %v91 = vunpack.c.l.b16 %v46
    %v92 = vpack.c.b16 %v77, %v76
    %v93 = vpack.c.b16 %v79, %v78
    %v94 = vpack.c.b16 %v81, %v80
    %v95 = vpack.c.b16 %v83, %v82
    %v96 = vpack.c.b16 %v85, %v84
    %v97 = vpack.c.b16 %v87, %v86
    %v98 = vpack.c.b16 %v89, %v88
    %v99 = vpack.c.b16 %v91, %v90
    %108 = vmatprep.subr.bf16.mxu0 0
    %109 = vmatpush1.bf16.msra.mxu0 %v92
    %110 = vmatprep.subr.bf16.mxu0 0
    %111 = vmatpush1.bf16.msra.mxu0 %v93
    %112 = vmatprep.subr.bf16.mxu0 0
    %113 = vmatpush1.bf16.msra.mxu0 %v94
    %114 = vmatprep.subr.bf16.mxu0 0
    %115 = vmatpush1.bf16.msra.mxu0 %v95
    %116 = vmatprep.subr.bf16.mxu0 0
    %117 = vmatpush1.bf16.msra.mxu0 %v96
    %118 = vmatprep.subr.bf16.mxu0 0
    %119 = vmatpush1.bf16.msra.mxu0 %v97
    %120 = vmatprep.subr.bf16.mxu0 0
    %121 = vmatpush1.bf16.msra.mxu0 %v98
    %122 = vmatprep.subr.bf16.mxu0 0
    %123 = vmatpush1.bf16.msra.mxu0 %v99
    %124 = vmatprep.subr.bf16.mxu0 0
    %125 = vmatpush1.bf16.msra.mxu0 0
    %126 = vmatprep.subr.bf16.mxu0 0
    %127 = vmatpush1.bf16.msra.mxu0 0
    %128 = vmatprep.subr.bf16.mxu0 0
    %129 = vmatpush1.bf16.msra.mxu0 0
    %130 = vmatprep.subr.bf16.mxu0 0
    %131 = vmatpush1.bf16.msra.mxu0 0
    %132 = vmatprep.subr.bf16.mxu0 0
    %133 = vmatpush1.bf16.msra.mxu0 0
    %134 = vmatprep.subr.bf16.mxu0 0
    %135 = vmatpush1.bf16.msra.mxu0 0
    %136 = vmatprep.subr.bf16.mxu0 0
    %137 = vmatpush1.bf16.msra.mxu0 0
    %138 = vmatprep.subr.bf16.mxu0 0
    %139 = vmatpush1.bf16.msra.mxu0 0
    %140 = vmatprep.mubr.bf16.mxu0 0
    %141 = vmatmul.mubr.bf16.gmra.mrb[0].mxu0 %v58
    %v142 = vpop.f32.mrb[0].mxu0
    %v143 = vadd.f32 %v52, %v142
    %v144 = vpop.f32.mrb[0].mxu0
    %v145 = vpop.f32.mrb[0].mxu0
    %v146 = vadd.f32 %v52, %v145
    %v147 = vpop.f32.mrb[0].mxu0
    %148 = vdwg.mxu0
    %vm149 = vcmp.gt.f32.partialorder %v143, 0.0
    %vm150 = vcmp.gt.f32.partialorder %v146, 0.0
    %v151 = vmul.f32 %v143, 0.01
    %v152 = vmul.f32 %v146, 0.01
    %v153 = vsel %vm149, %v143, %v151
    %v154 = vsel %vm150, %v146, %v152
    %v155 = vpack.c.bf16 %v154, %v153
    %v156 = vld [vmem:[#allocation2 + $0x4] sm:$0xf]
    %v157 = vld [vmem:[#allocation2 + $0x10] sm:$0xf]
    %v158 = vld [vmem:[#allocation2 + $0x1c] sm:$0xf]
    %v159 = vld [vmem:[#allocation2 + $0x28] sm:$0xf]
    %v160 = vld [vmem:[#allocation2 + $0x34] sm:$0xf]
    %v161 = vld [vmem:[#allocation2 + $0x40] sm:$0xf]
    %v162 = vld [vmem:[#allocation2 + $0x4c] sm:$0xf]
    %v163 = vld [vmem:[#allocation2 + $0x58] sm:$0xf]
    %v164 = vld [vmem:[#allocation2 + $0x64] sm:$0xf]
    %v165 = vld [vmem:[#allocation2 + $0x70] sm:$0xf]
    %v166 = vld [vmem:[#allocation2 + $0x7c] sm:$0xf]
    %v167 = vld [vmem:[#allocation2 + $0x88] sm:$0xf]
    %v168 = vld [vmem:[#allocation2 + $0x94] sm:$0xf]
    %v169 = vld [vmem:[#allocation2 + $0xa0] sm:$0xf]
    %v170 = vld [vmem:[#allocation2 + $0xac] sm:$0xf]
    %v171 = vld [vmem:[#allocation2 + $0xb8] sm:$0xf]
    %v172 = vld [vmem:[%s2 + $0x1] sm:$0x1]
    %v174 = vlaneseq
    %v175 = vshrl.u32 %v174, 7
    %v176 = vsub.s32 0, %v175
    %v177 = vrot.slane %v172, %v176
    %v195 = vunpack.c.l.b16 %v156
    %v196 = vunpack.c.l.b16 %v157
    %v197 = vunpack.c.l.b16 %v158
    %v198 = vunpack.c.l.b16 %v159
    %v199 = vunpack.c.l.b16 %v160
    %v200 = vunpack.c.l.b16 %v161
    %v201 = vunpack.c.l.b16 %v162
    %v202 = vunpack.c.l.b16 %v163
    %v203 = vunpack.c.l.b16 %v164
    %v204 = vunpack.c.l.b16 %v165
    %v205 = vunpack.c.l.b16 %v166
    %v206 = vunpack.c.l.b16 %v167
    %v207 = vunpack.c.l.b16 %v168
    %v208 = vunpack.c.l.b16 %v169
    %v209 = vunpack.c.l.b16 %v170
    %v210 = vunpack.c.l.b16 %v171
    %v211 = vpack.c.b16 %v196, %v195
    %v212 = vpack.c.b16 %v198, %v197
    %v213 = vpack.c.b16 %v200, %v199
    %v214 = vpack.c.b16 %v202, %v201
    %v215 = vpack.c.b16 %v204, %v203
    %v216 = vpack.c.b16 %v206, %v205
    %v217 = vpack.c.b16 %v208, %v207
    %v218 = vpack.c.b16 %v210, %v209
    %227 = vmatprep.subr.bf16.mxu0 0
    %228 = vmatpush1.bf16.msra.mxu0 %v211
    %229 = vmatprep.subr.bf16.mxu0 0
    %230 = vmatpush1.bf16.msra.mxu0 %v212
    %231 = vmatprep.subr.bf16.mxu0 0
    %232 = vmatpush1.bf16.msra.mxu0 %v213
    %233 = vmatprep.subr.bf16.mxu0 0
    %234 = vmatpush1.bf16.msra.mxu0 %v214
    %235 = vmatprep.subr.bf16.mxu0 0
    %236 = vmatpush1.bf16.msra.mxu0 %v215
    %237 = vmatprep.subr.bf16.mxu0 0
    %238 = vmatpush1.bf16.msra.mxu0 %v216
    %239 = vmatprep.subr.bf16.mxu0 0
    %240 = vmatpush1.bf16.msra.mxu0 %v217
    %241 = vmatprep.subr.bf16.mxu0 0
    %242 = vmatpush1.bf16.msra.mxu0 %v218
    %243 = vmatprep.subr.bf16.mxu0 0
    %244 = vmatpush1.bf16.msra.mxu0 0
    %245 = vmatprep.subr.bf16.mxu0 0
    %246 = vmatpush1.bf16.msra.mxu0 0
    %247 = vmatprep.subr.bf16.mxu0 0
    %248 = vmatpush1.bf16.msra.mxu0 0
    %249 = vmatprep.subr.bf16.mxu0 0
    %250 = vmatpush1.bf16.msra.mxu0 0
    %251 = vmatprep.subr.bf16.mxu0 0
    %252 = vmatpush1.bf16.msra.mxu0 0
    %253 = vmatprep.subr.bf16.mxu0 0
    %254 = vmatpush1.bf16.msra.mxu0 0
    %255 = vmatprep.subr.bf16.mxu0 0
    %256 = vmatpush1.bf16.msra.mxu0 0
    %257 = vmatprep.subr.bf16.mxu0 0
    %258 = vmatpush1.bf16.msra.mxu0 0
    %259 = vmatprep.mubr.bf16.mxu0 0
    %260 = vmatmul.mubr.bf16.gmra.mrb[0].mxu0 %v155
    %v261 = vpop.f32.mrb[0].mxu0
    %v262 = vadd.f32 %v177, %v261
    %v263 = vpop.f32.mrb[0].mxu0
    %v264 = vpop.f32.mrb[0].mxu0
    %v265 = vadd.f32 %v177, %v264
    %v266 = vpop.f32.mrb[0].mxu0
    %267 = vdwg.mxu0
    %vm268 = vcmp.gt.f32.partialorder %v262, 0.0
    %vm269 = vcmp.gt.f32.partialorder %v265, 0.0
    %v270 = vmul.f32 %v262, 0.01
    %v271 = vmul.f32 %v265, 0.01
    %v272 = vsel %vm268, %v262, %v270
    %v273 = vsel %vm269, %v265, %v271
    %v274 = vpack.c.bf16 %v273, %v272
    %v275 = vld [vmem:[#allocation2 + $0x8] sm:$0xf]
    %v276 = vld [vmem:[#allocation2 + $0x14] sm:$0xf]
    %v277 = vld [vmem:[#allocation2 + $0x20] sm:$0xf]
    %v278 = vld [vmem:[#allocation2 + $0x2c] sm:$0xf]
    %v279 = vld [vmem:[#allocation2 + $0x38] sm:$0xf]
    %v280 = vld [vmem:[#allocation2 + $0x44] sm:$0xf]
    %v281 = vld [vmem:[#allocation2 + $0x50] sm:$0xf]
    %v282 = vld [vmem:[#allocation2 + $0x5c] sm:$0xf]
    %v283 = vld [vmem:[#allocation2 + $0x68] sm:$0xf]
    %v284 = vld [vmem:[#allocation2 + $0x74] sm:$0xf]
    %v285 = vld [vmem:[#allocation2 + $0x80] sm:$0xf]
    %v286 = vld [vmem:[#allocation2 + $0x8c] sm:$0xf]
    %v287 = vld [vmem:[#allocation2 + $0x98] sm:$0xf]
    %v288 = vld [vmem:[#allocation2 + $0xa4] sm:$0xf]
    %v289 = vld [vmem:[#allocation2 + $0xb0] sm:$0xf]
    %v290 = vld [vmem:[#allocation2 + $0xbc] sm:$0xf]
    %v291 = vld [vmem:[%s2 + $0x2] sm:$0x1]
    %v293 = vlaneseq
    %v294 = vshrl.u32 %v293, 7
    %v295 = vsub.s32 0, %v294
    %v296 = vrot.slane %v291, %v295
    %v314 = vunpack.c.l.b16 %v275
    %v315 = vunpack.c.l.b16 %v276
    %v316 = vunpack.c.l.b16 %v277
    %v317 = vunpack.c.l.b16 %v278
    %v318 = vunpack.c.l.b16 %v279
    %v319 = vunpack.c.l.b16 %v280
    %v320 = vunpack.c.l.b16 %v281
    %v321 = vunpack.c.l.b16 %v282
    %v322 = vunpack.c.l.b16 %v283
    %v323 = vunpack.c.l.b16 %v284
    %v324 = vunpack.c.l.b16 %v285
    %v325 = vunpack.c.l.b16 %v286
    %v326 = vunpack.c.l.b16 %v287
    %v327 = vunpack.c.l.b16 %v288
    %v328 = vunpack.c.l.b16 %v289
    %v329 = vunpack.c.l.b16 %v290
    %v330 = vpack.c.b16 %v315, %v314
    %v331 = vpack.c.b16 %v317, %v316
    %v332 = vpack.c.b16 %v319, %v318
    %v333 = vpack.c.b16 %v321, %v320
    %v334 = vpack.c.b16 %v323, %v322
    %v335 = vpack.c.b16 %v325, %v324
    %v336 = vpack.c.b16 %v327, %v326
    %v337 = vpack.c.b16 %v329, %v328
    %346 = vmatprep.subr.bf16.mxu0 0
    %347 = vmatpush1.bf16.msra.mxu0 %v330
    %348 = vmatprep.subr.bf16.mxu0 0
    %349 = vmatpush1.bf16.msra.mxu0 %v331
    %350 = vmatprep.subr.bf16.mxu0 0
    %351 = vmatpush1.bf16.msra.mxu0 %v332
    %352 = vmatprep.subr.bf16.mxu0 0
    %353 = vmatpush1.bf16.msra.mxu0 %v333
    %354 = vmatprep.subr.bf16.mxu0 0
    %355 = vmatpush1.bf16.msra.mxu0 %v334
    %356 = vmatprep.subr.bf16.mxu0 0
    %357 = vmatpush1.bf16.msra.mxu0 %v335
    %358 = vmatprep.subr.bf16.mxu0 0
    %359 = vmatpush1.bf16.msra.mxu0 %v336
    %360 = vmatprep.subr.bf16.mxu0 0
    %361 = vmatpush1.bf16.msra.mxu0 %v337
    %362 = vmatprep.subr.bf16.mxu0 0
    %363 = vmatpush1.bf16.msra.mxu0 0
    %364 = vmatprep.subr.bf16.mxu0 0
    %365 = vmatpush1.bf16.msra.mxu0 0
    %366 = vmatprep.subr.bf16.mxu0 0
    %367 = vmatpush1.bf16.msra.mxu0 0
    %368 = vmatprep.subr.bf16.mxu0 0
    %369 = vmatpush1.bf16.msra.mxu0 0
    %370 = vmatprep.subr.bf16.mxu0 0
    %371 = vmatpush1.bf16.msra.mxu0 0
    %372 = vmatprep.subr.bf16.mxu0 0
    %373 = vmatpush1.bf16.msra.mxu0 0
    %374 = vmatprep.subr.bf16.mxu0 0
    %375 = vmatpush1.bf16.msra.mxu0 0
    %376 = vmatprep.subr.bf16.mxu0 0
    %377 = vmatpush1.bf16.msra.mxu0 0
    %378 = vmatprep.mubr.bf16.mxu0 0
    %379 = vmatmul.mubr.bf16.gmra.mrb[0].mxu0 %v274
    %v380 = vpop.f32.mrb[0].mxu0
    %v381 = vadd.f32 %v296, %v380
    %v382 = vpop.f32.mrb[0].mxu0
    %v383 = vpop.f32.mrb[0].mxu0
    %v384 = vadd.f32 %v296, %v383
    %v385 = vpop.f32.mrb[0].mxu0
    %386 = vdwg.mxu0
    %v387 = vmax.f32 %v381, -80.0
    %v388 = vmax.f32 %v384, -80.0
    %v389 = vmin.f32 %v387, 80.0
    %v390 = vmin.f32 %v388, 80.0
    %v391 = vmul.f32 %v389, 1.442695
    %v392 = vpow.pop %v391
    %v393 = vmul.f32 %v390, 1.442695
    %v394 = vpow.pop %v393
    %v395 = vadd.f32 %v392, 1.0
    %v396 = vadd.f32 %v394, 1.0
    %v397 = vrcp.pop %v395
    %v398 = vrcp.pop %v396
    %v399 = vmax.f32 %v397, 0.0
    %v400 = vmax.f32 %v398, 0.0
    %v401 = vmin.f32 %v399, 1.0
    %v402 = vmin.f32 %v400, 1.0
    %v403 = vlaneseq
    %v404 = vand.u32 %v403, 127
    %vm405 = vcmp.eq.s32.totalorder %v404, 0
    %v406 = vsub.f32 1.0, %v401
    %v407 = vsub.f32 1.0, %v402
    %v408 = vsel %vm405, %v401, %v406
    %v409 = vsel %vm405, %v402, %v407
    %v410 = vpack.c.bf16 %v409, %v408
    %v412 = vunpack.c.l.b16 %v410
    %v413 = vunpack.c.h.b16 %v410
    %v414 = vpack.c.b16 %v412, %v412
    %v415 = vpack.c.b16 %v413, %v413
    %418 = vst [vmem:[%s3] sm:$0xf] %v414
    %419 = vst [vmem:[%s3 + $0x4] sm:$0xf] %v415
    // Predicated region
    $region18: #{actor_forward.1} parent=1 // pred_check
      _
    $region19: #{actor_forward.1} parent=1 // pred_check_branch
      %421 = sbr.rel (0) target = $region21
    $region20: #{actor_forward.1} parent=1 // pred_region
      _
    $region21: #{actor_forward.1} parent=1 // pred_fallthru
      _
    // Predicated region
    $region22: #{actor_forward.1} parent=1 // pred_check
      _
    $region23: #{actor_forward.1} parent=1 // pred_check_branch
      %423 = sbr.rel (0) target = $region25
    $region24: #{actor_forward.1} parent=1 // pred_region
      _
    $region25: #{actor_forward.1} parent=1 // pred_fallthru
      _
    %424 = vsyncpa [#allocation3], 1

</llo_original>
